<compile_context>
chip_gen: v7x
topology: tpu7x:2x2x1
jax: 0.10.0
libtpu: 0.0.40
codegen_flags: <defaults>
</compile_context>

<pallas_src>
import jax
import jax.numpy as jnp
from jax import lax
from jax.experimental import pallas as pl
from jax.experimental.pallas import tpu as pltpu

_CHUNK = 256  # lane sub-tile: one full-width MXU pass on v6e/v7x, two on v5e


def _round_up(n, m):
    return ((n + m - 1) // m) * m


def ddpg_actor_kernel(x_ref, w1_ref, b1_ref, w2_ref, b2_ref, wot_ref, bo_ref,
                      o_ref):
    """One (tile_b, F) batch tile; batch ends up on lanes; output (A, tile_b)."""
    w1 = w1_ref[...]        # (H1, F)   bf16   -- resident across the grid
    w2 = w2_ref[...]        # (H2, H1)  bf16
    b1 = b1_ref[...]        # (H1, 1)   f32
    b2 = b2_ref[...]        # (H2, 1)   f32
    wot = wot_ref[...]      # (H2, A)   f32
    bo = bo_ref[...]        # (A, 1)    f32
    n_actions = wot.shape[1]
    tile_b = x_ref.shape[0]

    # Fully-unrolled static chunk loop (what fori_loop(..., unroll=True) would
    # produce, but with constant, trivially-aligned slice offsets): h1/h2 stay
    # in vregs and never round-trip through VMEM between the three layers.
    for start in range(0, tile_b, _CHUNK):
        # (C, F) f32 slice of the natively-laid-out x tile -> bf16 for the MXU.
        xc = x_ref[pl.ds(start, _CHUNK), :].astype(jnp.bfloat16)

        # Layer 1: W1 @ xc^T -> (H1, C).  Transposed-RHS dot keeps the batch
        # on lanes without materializing a transpose of x.
        h1 = lax.dot_general(w1, xc, (((1,), (1,)), ((), ())),
                             preferred_element_type=jnp.float32)
        h1 = jnp.maximum(h1 + b1, 0.0).astype(jnp.bfloat16)

        # Layer 2: (H2, H1) @ (H1, C) -> (H2, C)
        h2 = jnp.dot(w2, h1, preferred_element_type=jnp.float32)
        h2 = jnp.maximum(h2 + b2, 0.0)

        # Output projection (M = n_actions is tiny): keep it off the
        # under-filled MXU -- VPU broadcast-multiply + XLU sublane reduce.
        if n_actions == 1:
            logits = jnp.sum(h2 * wot, axis=0, keepdims=True)        # (1, C)
        else:  # general fallback: transposed-LHS dot on the MXU
            logits = lax.dot_general(wot, h2, (((0,), (0,)), ((), ())),
                                     preferred_element_type=jnp.float32)
        logits = logits + bo                                          # (A, C)

        # Sigmoid via EUP exp + approx reciprocal; lane-dense 256-wide store.
        o_ref[:, pl.ds(start, _CHUNK)] = pl.reciprocal(
            1.0 + jnp.exp(-logits), approx=True)


def _choose_tile(batch, tile_b):
    """Batch tile: a multiple of 256 (full MXU lane width on v6e/v7x), as
    large as requested to amortize per-grid-step overhead, but keeping the
    grid >= 2 whenever the batch allows so v7x can use both TensorCores."""
    b256 = _round_up(max(batch, 1), 256)
    tb = min(max(256, _round_up(tile_b, 256)), b256)
    if b256 >= 2 * 256 and pl.cdiv(b256, tb) < 2:
        tb = _round_up(pl.cdiv(b256, 2), 256)
    return tb


def ddpg_actor_forward(x, params, *, tile_b=4096):
    """x: (B, F) float32 in native layout.  params: PyTorch-style (out, in)
    weights and (out, 1) biases.  Returns (B, A) float32 (module semantics).

    Note: weights feeding the MXU are down-cast to bf16 (f32 accumulation) and
    the sigmoid reciprocal is the EUP approximation -- not bit-identical to
    the f32 PyTorch module, but within the tolerances asserted below."""
    B, F = x.shape
    w1, b1 = params["w1"], params["b1"]
    w2, b2 = params["w2"], params["b2"]
    wo, bo = params["wo"], params["bo"]
    H1, H2, A = w1.shape[0], w2.shape[0], wo.shape[0]

    tb = _choose_tile(B, tile_b)
    assert tb % _CHUNK == 0
    grid = (pl.cdiv(B, tb),)

    # Tiny weight-side prep (negligible bytes): bf16 for the MXU operands and
    # a pre-transposed (H2, A) output weight for the VPU projection.
    w1b = w1.astype(jnp.bfloat16)
    w2b = w2.astype(jnp.bfloat16)
    wot = jnp.transpose(wo)                      # (H2, A), f32

    const = lambda i: (0, 0)   # weights/biases: same block every step -> resident
    out_t = pl.pallas_call(
        ddpg_actor_kernel,
        out_shape=jax.ShapeDtypeStruct((A, B), jnp.float32),
        grid=grid,
        in_specs=[
            pl.BlockSpec((tb, F), lambda i: (i, 0)),   # streamed x tile, native layout
            pl.BlockSpec((H1, F), const),
            pl.BlockSpec((H1, 1), const),
            pl.BlockSpec((H2, H1), const),
            pl.BlockSpec((H2, 1), const),
            pl.BlockSpec((H2, A), const),
            pl.BlockSpec((A, 1), const),
        ],
        out_specs=pl.BlockSpec((A, tb), lambda i: (0, i)),
        compiler_params=pltpu.CompilerParams(
            dimension_semantics=("parallel",)),
    )(x, w1b, b1, w2b, b2, wot, bo)

    # (A, B) -> (B, A); for A == 1 this is a pure reshape (no data movement).
    return jnp.transpose(out_t)


def init_params(key, n_in=11, h1=32, h2=32, n_actions=1,
                init_bounds=(-0.003, 0.003)):
    """Mirror nn.Linear defaults (U(-1/sqrt(fan_in), +)) plus the module's
    custom uniform init on the output-layer weight.  Weights are stored
    PyTorch-style (out, in); biases as (out, 1)."""
    k1, k2, k3, k4, k5, k6 = jax.random.split(key, 6)

    def lin_init(kw, kb, fan_in, fan_out):
        bound = 1.0 / float(fan_in) ** 0.5
        w = jax.random.uniform(kw, (fan_out, fan_in), jnp.float32, -bound, bound)
        b = jax.random.uniform(kb, (fan_out, 1), jnp.float32, -bound, bound)
        return w, b

    w1, b1 = lin_init(k1, k2, n_in, h1)
    w2, b2 = lin_init(k3, k4, h1, h2)
    wo = jax.random.uniform(k5, (n_actions, h2), jnp.float32,
                            init_bounds[0], init_bounds[1])
    bo_bound = 1.0 / float(h2) ** 0.5
    bo = jax.random.uniform(k6, (n_actions, 1), jnp.float32, -bo_bound, bo_bound)
    return {"w1": w1, "b1": b1, "w2": w2, "b2": b2, "wo": wo, "bo": bo}


def ref_forward(x, params, mirror_bf16):
    """Pure-JAX reference.  mirror_bf16=True reproduces the kernel's casts."""
    def mb(a):
        return a.astype(jnp.bfloat16).astype(jnp.float32) if mirror_bf16 else a
    h1 = jnp.maximum(mb(x) @ mb(params["w1"]).T + params["b1"].T, 0.0)
    h2 = jnp.maximum(mb(h1) @ mb(params["w2"]).T + params["b2"].T, 0.0)
    logits = h2 @ params["wo"].T + params["bo"].T
    return jax.nn.sigmoid(logits)


if __name__ == "__main__":
    key = jax.random.PRNGKey(0)
    kx, kp = jax.random.split(key)

    # Small shapes consistent with the module; B=640 exercises a 2-step grid
    # (tile 512) including a ragged edge block and two inner 256-lane chunks.
    B, F = 640, 11
    x = jax.random.normal(kx, (B, F), dtype=jnp.float32)
    params = init_params(kp, n_in=F, h1=32, h2=32, n_actions=1)

    out = jax.block_until_ready(ddpg_actor_forward(x, params))
    assert out.shape == (B, 1)

    # Tight check vs a reference mirroring the kernel's bf16 casts, and a
    # looser check vs the pure-f32 PyTorch module semantics.
    ref_bf16 = ref_forward(x, params, mirror_bf16=True)
    ref_f32 = ref_forward(x, params, mirror_bf16=False)
    assert jnp.allclose(out, ref_bf16, atol=5e-3), "mismatch vs bf16-mirrored reference"
    assert jnp.allclose(out, ref_f32, atol=2e-2), "mismatch vs f32 reference"

    print("KERNEL_OK")
</pallas_src>

<mosaic_0001>
module attributes {stable_mosaic.version = 11 : i64} {
  func.func @ddpg_actor_kernel(%arg0: i32, %arg1: memref<512x11xf32, #tpu.memory_space<vmem>>, %arg2: memref<32x11xbf16, #tpu.memory_space<vmem>>, %arg3: memref<32x1xf32, #tpu.memory_space<vmem>>, %arg4: memref<32x32xbf16, #tpu.memory_space<vmem>>, %arg5: memref<32x1xf32, #tpu.memory_space<vmem>>, %arg6: memref<32x1xf32, #tpu.memory_space<vmem>>, %arg7: memref<1x1xf32, #tpu.memory_space<vmem>>, %arg8: memref<1x512xf32, #tpu.memory_space<vmem>>) attributes {dimension_semantics = [#tpu.dimension_semantics<parallel>], iteration_bounds = array<i64: 2>, scalar_prefetch = 0 : i64, scratch_operands = 0 : i64, tpu.core_type = #tpu.core_type<tc>, window_params = [{transform_indices = @transform_0, window_bounds = array<i64: 512, 11>}, {pipeline_mode = #tpu.pipeline_mode<synchronous>, transform_indices = @transform_1, window_bounds = array<i64: 32, 11>}, {pipeline_mode = #tpu.pipeline_mode<synchronous>, transform_indices = @transform_2, window_bounds = array<i64: 32, 1>}, {pipeline_mode = #tpu.pipeline_mode<synchronous>, transform_indices = @transform_3, window_bounds = array<i64: 32, 32>}, {pipeline_mode = #tpu.pipeline_mode<synchronous>, transform_indices = @transform_4, window_bounds = array<i64: 32, 1>}, {pipeline_mode = #tpu.pipeline_mode<synchronous>, transform_indices = @transform_5, window_bounds = array<i64: 32, 1>}, {pipeline_mode = #tpu.pipeline_mode<synchronous>, transform_indices = @transform_6, window_bounds = array<i64: 1, 1>}, {transform_indices = @transform_7, window_bounds = array<i64: 1, 512>}]} {
    %c0 = arith.constant 0 : index
    %c0_0 = arith.constant 0 : index
    %0 = vector.load %arg2[%c0, %c0_0] : memref<32x11xbf16, #tpu.memory_space<vmem>>, vector<32x11xbf16>
    %c0_1 = arith.constant 0 : index
    %c0_2 = arith.constant 0 : index
    %1 = vector.load %arg4[%c0_1, %c0_2] : memref<32x32xbf16, #tpu.memory_space<vmem>>, vector<32x32xbf16>
    %c0_3 = arith.constant 0 : index
    %c0_4 = arith.constant 0 : index
    %2 = vector.load %arg3[%c0_3, %c0_4] : memref<32x1xf32, #tpu.memory_space<vmem>>, vector<32x1xf32>
    %c0_5 = arith.constant 0 : index
    %c0_6 = arith.constant 0 : index
    %3 = vector.load %arg5[%c0_5, %c0_6] : memref<32x1xf32, #tpu.memory_space<vmem>>, vector<32x1xf32>
    %c0_7 = arith.constant 0 : index
    %c0_8 = arith.constant 0 : index
    %4 = vector.load %arg6[%c0_7, %c0_8] : memref<32x1xf32, #tpu.memory_space<vmem>>, vector<32x1xf32>
    %c0_9 = arith.constant 0 : index
    %c0_10 = arith.constant 0 : index
    %5 = vector.load %arg7[%c0_9, %c0_10] : memref<1x1xf32, #tpu.memory_space<vmem>>, vector<1x1xf32>
    %c0_11 = arith.constant 0 : index
    %c0_12 = arith.constant 0 : index
    %6 = vector.load %arg1[%c0_11, %c0_12] : memref<512x11xf32, #tpu.memory_space<vmem>>, vector<256x11xf32>
    %7 = arith.truncf %6 : vector<256x11xf32> to vector<256x11xbf16>
    %cst = arith.constant dense<0.000000e+00> : vector<32x256xf32>
    %8 = tpu.matmul %0, %7, %cst {dimension_numbers = #tpu.dot_dimension_numbers<[1], [1], [0], [0], [0, 0, 1, 0], [], []>} : vector<32x11xbf16>, vector<256x11xbf16>, vector<32x256xf32> -> vector<32x256xf32>
    %9 = vector.broadcast %2 : vector<32x1xf32> to vector<32x256xf32>
    %10 = arith.addf %8, %9 : vector<32x256xf32>
    %cst_13 = arith.constant 0.000000e+00 : f32
    %11 = vector.broadcast %cst_13 : f32 to vector<32x256xf32>
    %12 = arith.maximumf %10, %11 : vector<32x256xf32>
    %13 = arith.truncf %12 : vector<32x256xf32> to vector<32x256xbf16>
    %cst_14 = arith.constant dense<0.000000e+00> : vector<32x256xf32>
    %14 = tpu.matmul %1, %13, %cst_14 {dimension_numbers = #tpu.dot_dimension_numbers<[1], [0], [0], [1], [0, 0, 1, 1], [], []>} : vector<32x32xbf16>, vector<32x256xbf16>, vector<32x256xf32> -> vector<32x256xf32>
    %15 = vector.broadcast %3 : vector<32x1xf32> to vector<32x256xf32>
    %16 = arith.addf %14, %15 : vector<32x256xf32>
    %cst_15 = arith.constant 0.000000e+00 : f32
    %17 = vector.broadcast %cst_15 : f32 to vector<32x256xf32>
    %18 = arith.maximumf %16, %17 : vector<32x256xf32>
    %19 = vector.broadcast %4 : vector<32x1xf32> to vector<32x256xf32>
    %20 = arith.mulf %18, %19 : vector<32x256xf32>
    %cst_16 = arith.constant dense<0.000000e+00> : vector<256xf32>
    %21 = vector.multi_reduction <add>, %20, %cst_16 [0] : vector<32x256xf32> to vector<256xf32>
    %22 = vector.shape_cast %21 : vector<256xf32> to vector<1x256xf32>
    %23 = vector.broadcast %5 : vector<1x1xf32> to vector<1x256xf32>
    %24 = arith.addf %22, %23 : vector<1x256xf32>
    %cst_17 = arith.constant 0.000000e+00 : f32
    %25 = vector.broadcast %cst_17 : f32 to vector<1x256xf32>
    %26 = arith.subf %25, %24 : vector<1x256xf32>
    %27 = math.exp %26 : vector<1x256xf32>
    %cst_18 = arith.constant 1.000000e+00 : f32
    %28 = vector.broadcast %cst_18 : f32 to vector<1x256xf32>
    %29 = arith.addf %28, %27 : vector<1x256xf32>
    %30 = tpu.reciprocal %29 {approx = true} : vector<1x256xf32> -> vector<1x256xf32>
    %c0_19 = arith.constant 0 : index
    %c0_20 = arith.constant 0 : index
    %31 = vector.load %arg8[%c0_19, %c0_20] : memref<1x512xf32, #tpu.memory_space<vmem>>, vector<1x256xf32>
    tpu.vector_store %arg8[%c0_19, %c0_20], %30 {strides = array<i32>} : memref<1x512xf32, #tpu.memory_space<vmem>>, vector<1x256xf32>,
    %c256 = arith.constant 256 : index
    %c0_21 = arith.constant 0 : index
    %32 = vector.load %arg1[%c256, %c0_21] : memref<512x11xf32, #tpu.memory_space<vmem>>, vector<256x11xf32>
    %33 = arith.truncf %32 : vector<256x11xf32> to vector<256x11xbf16>
    %cst_22 = arith.constant dense<0.000000e+00> : vector<32x256xf32>
    %34 = tpu.matmul %0, %33, %cst_22 {dimension_numbers = #tpu.dot_dimension_numbers<[1], [1], [0], [0], [0, 0, 1, 0], [], []>} : vector<32x11xbf16>, vector<256x11xbf16>, vector<32x256xf32> -> vector<32x256xf32>
    %35 = vector.broadcast %2 : vector<32x1xf32> to vector<32x256xf32>
    %36 = arith.addf %34, %35 : vector<32x256xf32>
    %cst_23 = arith.constant 0.000000e+00 : f32
    %37 = vector.broadcast %cst_23 : f32 to vector<32x256xf32>
    %38 = arith.maximumf %36, %37 : vector<32x256xf32>
    %39 = arith.truncf %38 : vector<32x256xf32> to vector<32x256xbf16>
    %cst_24 = arith.constant dense<0.000000e+00> : vector<32x256xf32>
    %40 = tpu.matmul %1, %39, %cst_24 {dimension_numbers = #tpu.dot_dimension_numbers<[1], [0], [0], [1], [0, 0, 1, 1], [], []>} : vector<32x32xbf16>, vector<32x256xbf16>, vector<32x256xf32> -> vector<32x256xf32>
    %41 = vector.broadcast %3 : vector<32x1xf32> to vector<32x256xf32>
    %42 = arith.addf %40, %41 : vector<32x256xf32>
    %cst_25 = arith.constant 0.000000e+00 : f32
    %43 = vector.broadcast %cst_25 : f32 to vector<32x256xf32>
    %44 = arith.maximumf %42, %43 : vector<32x256xf32>
    %45 = vector.broadcast %4 : vector<32x1xf32> to vector<32x256xf32>
    %46 = arith.mulf %44, %45 : vector<32x256xf32>
    %cst_26 = arith.constant dense<0.000000e+00> : vector<256xf32>
    %47 = vector.multi_reduction <add>, %46, %cst_26 [0] : vector<32x256xf32> to vector<256xf32>
    %48 = vector.shape_cast %47 : vector<256xf32> to vector<1x256xf32>
    %49 = vector.broadcast %5 : vector<1x1xf32> to vector<1x256xf32>
    %50 = arith.addf %48, %49 : vector<1x256xf32>
    %cst_27 = arith.constant 0.000000e+00 : f32
    %51 = vector.broadcast %cst_27 : f32 to vector<1x256xf32>
    %52 = arith.subf %51, %50 : vector<1x256xf32>
    %53 = math.exp %52 : vector<1x256xf32>
    %cst_28 = arith.constant 1.000000e+00 : f32
    %54 = vector.broadcast %cst_28 : f32 to vector<1x256xf32>
    %55 = arith.addf %54, %53 : vector<1x256xf32>
    %56 = tpu.reciprocal %55 {approx = true} : vector<1x256xf32> -> vector<1x256xf32>
    %c0_29 = arith.constant 0 : index
    %c256_30 = arith.constant 256 : index
    %57 = vector.load %arg8[%c0_29, %c256_30] : memref<1x512xf32, #tpu.memory_space<vmem>>, vector<1x256xf32>
    tpu.vector_store %arg8[%c0_29, %c256_30], %56 {strides = array<i32>} : memref<1x512xf32, #tpu.memory_space<vmem>>, vector<1x256xf32>,
    return
  }
  func.func @transform_0(%arg0: i32) -> (i32, i32) {
    %c0_i32 = arith.constant 0 : i32
    %c0_i32_0 = arith.constant 0 : i32
    return %arg0, %c0_i32 : i32, i32
  }
  func.func @transform_1(%arg0: i32) -> (i32, i32) {
    %c0_i32 = arith.constant 0 : i32
    %c0_i32_0 = arith.constant 0 : i32
    %c0_i32_1 = arith.constant 0 : i32
    return %c0_i32, %c0_i32_0 : i32, i32
  }
  func.func @transform_2(%arg0: i32) -> (i32, i32) {
    %c0_i32 = arith.constant 0 : i32
    %c0_i32_0 = arith.constant 0 : i32
    %c0_i32_1 = arith.constant 0 : i32
    return %c0_i32, %c0_i32_0 : i32, i32
  }
  func.func @transform_3(%arg0: i32) -> (i32, i32) {
    %c0_i32 = arith.constant 0 : i32
    %c0_i32_0 = arith.constant 0 : i32
    %c0_i32_1 = arith.constant 0 : i32
    return %c0_i32, %c0_i32_0 : i32, i32
  }
  func.func @transform_4(%arg0: i32) -> (i32, i32) {
    %c0_i32 = arith.constant 0 : i32
    %c0_i32_0 = arith.constant 0 : i32
    %c0_i32_1 = arith.constant 0 : i32
    return %c0_i32, %c0_i32_0 : i32, i32
  }
  func.func @transform_5(%arg0: i32) -> (i32, i32) {
    %c0_i32 = arith.constant 0 : i32
    %c0_i32_0 = arith.constant 0 : i32
    %c0_i32_1 = arith.constant 0 : i32
    return %c0_i32, %c0_i32_0 : i32, i32
  }
  func.func @transform_6(%arg0: i32) -> (i32, i32) {
    %c0_i32 = arith.constant 0 : i32
    %c0_i32_0 = arith.constant 0 : i32
    %c0_i32_1 = arith.constant 0 : i32
    return %c0_i32, %c0_i32_0 : i32, i32
  }
  func.func @transform_7(%arg0: i32) -> (i32, i32) {
    %c0_i32 = arith.constant 0 : i32
    %c0_i32_0 = arith.constant 0 : i32
    return %c0_i32, %arg0 : i32, i32
  }
}

</mosaic_0001>

<llo_original>
// kernel: tpu_custom_call.1
$region0: #{tpu_custom_call.1}
  #allocation0 [shape = 'u32[]', space=smem, size = 0x4, offset = 0x4, fixed_abs, tag = 'smem constant byte address 0x4 - core index']
  #allocation1 [shape = 'u32[144,128]{1,0:T(1,128)}', space=vmem, size = 0x12000, scoped, tag = 'internal scratch']
  #allocation2 [shape = 'f32[1,1]{1,0:T(1,128)S(1)}', space=vmem, size = 0x200, scoped, tag = 'scoped memory for tpu_custom_call.1']
  %s0 = inlined_call_operand.vmem [shape: f32[640,11], index: 0, kind: input, shape index: {}]
  %s1 = inlined_call_operand.vmem [shape: bf16[32,11], index: 1, kind: input, shape index: {}]
  %s2 = inlined_call_operand.vmem [shape: f32[32,1], index: 2, kind: input, shape index: {}]
  %s3 = inlined_call_operand.vmem [shape: bf16[32,32], index: 3, kind: input, shape index: {}]
  %s4 = inlined_call_operand.vmem [shape: f32[32,1], index: 4, kind: input, shape index: {}]
  %s5 = inlined_call_operand.vmem [shape: f32[32,1], index: 5, kind: input, shape index: {}]
  %s6 = inlined_call_operand.<no memory space> [shape: f32[1,1], index: 6, kind: input, shape index: {}]
  %s7 = inlined_call_operand.hbm [shape: f32[1,640], index: 7, kind: output, shape index: {}]
  %s8 = sld [smem:[#allocation0]]
  $region61: #{tpu_custom_call.1} parent=0
    _
  %s10 = ssub.s32 1, %s8
  %s11 = scalar_select 0, %s10, %s8
  %v12 = vstv %s6
  %13 = vst [vmem:[#allocation2] sm:$0x1] %v12
  $region1: #{tpu_custom_call.1} parent=0
    #allocation3 [shape = 'u8[4096]{0}', space=vmem, size = 0x1000, scoped, tag = 'output window, operand 0']
    #allocation4 [shape = 's32[2]{0}', space=sflag, size = 0x8, scoped, tag = 'scoped memory for tpu_custom_call.1']
    %14 = vsyncpa [#allocation4], 0
    %s15 = scalar_lea.sflag [#allocation4], 1
    %16 = vsyncpa %s15, 0
    loop: start=0, step=1, limit=4
    $region2: #{tpu_custom_call.1} parent=1 // loop_pre_header
      _
    $region3: #{tpu_custom_call.1} parent=1 // loop_header
      %s18 = sphi 0, %s22
      %p19 = scmp.ge.s32.totalorder %s18, 4
      %s28 = sphi 0, %s30
      %s31 = sphi 0, %s28
      %s32 = sphi 0, %s31
      %s48 = sphi 0, %s32
      %s52 = sphi 0, %s52
      %s54 = sphi 0, %s52
      %s55 = sphi 0, %s54
      %s69 = sphi 0, %s55
      %s73 = sphi 0, %s73
      %s75 = sphi 0, %s73
      %s76 = sphi 0, %s75
      %s90 = sphi 0, %s76
      %s94 = sphi 0, %s94
      %s96 = sphi 0, %s94
      %s97 = sphi 0, %s96
      %s111 = sphi 0, %s97
      %s115 = sphi 0, %s115
      %s117 = sphi 0, %s115
      %s118 = sphi 0, %s117
      %s132 = sphi 0, %s118
      %s136 = sphi 0, %s136
      %s138 = sphi 0, %s136
      %s139 = sphi 0, %s138
      %s153 = sphi 0, %s139
      %s157 = sphi 0, %s157
      %s159 = sphi 0, %s157
      %s160 = sphi 0, %s159
      %s174 = sphi 0, %s160
      %s180 = sphi 0, %s182
      %s183 = sphi 0, %s180
      %s184 = sphi 0, %s183
      %s200 = sphi 0, %s184
    $region4: #{tpu_custom_call.1} parent=1 // loop_header_branch
      %21 = sbr.rel (%p19) target = $region8
    $region5: #{tpu_custom_call.1} parent=1 // loop_body
      %s23 = ssub.s32 %s18, 1
      %s24 = ssub.s32 %s18, 2
      %s25 = sadd.s32 %s18, 1
      %s26 = ssub.s32 %s18, %s25
      %p27 = scmp.eq.s32.totalorder %s26, 0
      %s29 = sadd.s32 %s28, 1
      %s30 = scalar_select %p27, %s28, %s29
      %p33 = pneg %p27
      %p34 = scmp.eq.s32.totalorder %s18, 1
      %p35 = por %p33, %p34
      %p36 = scmp.ne.s32.totalorder %s28, %s31
      %p37 = scmp.eq.s32.totalorder %s18, 0
      %p38 = por %p36, %p37
      %p39 = scmp.ne.s32.totalorder %s28, %s31
      %p40 = scmp.eq.s32.totalorder %s23, 1
      %p41 = por %p39, %p40
      %p42 = scmp.ne.s32.totalorder %s31, %s32
      %p43 = scmp.eq.s32.totalorder %s23, 0
      %p44 = por %p42, %p43
      %p45 = scmp.ne.s32.totalorder %s31, %s32
      %p46 = scmp.eq.s32.totalorder %s24, 1
      %p47 = por %p45, %p46
      %p49 = scmp.ne.s32.totalorder %s32, %s48
      %p50 = scmp.eq.s32.totalorder %s24, 0
      %p51 = por %p49, %p50
      %s53 = sadd.s32 %s52, 1
      %p56 = scmp.eq.s32.totalorder %s18, 1
      %p57 = scmp.ne.s32.totalorder %s52, %s54
      %p58 = scmp.eq.s32.totalorder %s18, 0
      %p59 = por %p57, %p58
      %p60 = scmp.ne.s32.totalorder %s52, %s54
      %p61 = scmp.eq.s32.totalorder %s23, 1
      %p62 = por %p60, %p61
      %p63 = scmp.ne.s32.totalorder %s54, %s55
      %p64 = scmp.eq.s32.totalorder %s23, 0
      %p65 = por %p63, %p64
      %p66 = scmp.ne.s32.totalorder %s54, %s55
      %p67 = scmp.eq.s32.totalorder %s24, 1
      %p68 = por %p66, %p67
      %p70 = scmp.ne.s32.totalorder %s55, %s69
      %p71 = scmp.eq.s32.totalorder %s24, 0
      %p72 = por %p70, %p71
      %s74 = sadd.s32 %s73, 1
      %p77 = scmp.eq.s32.totalorder %s18, 1
      %p78 = scmp.ne.s32.totalorder %s73, %s75
      %p79 = scmp.eq.s32.totalorder %s18, 0
      %p80 = por %p78, %p79
      %p81 = scmp.ne.s32.totalorder %s73, %s75
      %p82 = scmp.eq.s32.totalorder %s23, 1
      %p83 = por %p81, %p82
      %p84 = scmp.ne.s32.totalorder %s75, %s76
      %p85 = scmp.eq.s32.totalorder %s23, 0
      %p86 = por %p84, %p85
      %p87 = scmp.ne.s32.totalorder %s75, %s76
      %p88 = scmp.eq.s32.totalorder %s24, 1
      %p89 = por %p87, %p88
      %p91 = scmp.ne.s32.totalorder %s76, %s90
      %p92 = scmp.eq.s32.totalorder %s24, 0
      %p93 = por %p91, %p92
      %s95 = sadd.s32 %s94, 1
      %p98 = scmp.eq.s32.totalorder %s18, 1
      %p99 = scmp.ne.s32.totalorder %s94, %s96
      %p100 = scmp.eq.s32.totalorder %s18, 0
      %p101 = por %p99, %p100
      %p102 = scmp.ne.s32.totalorder %s94, %s96
      %p103 = scmp.eq.s32.totalorder %s23, 1
      %p104 = por %p102, %p103
      %p105 = scmp.ne.s32.totalorder %s96, %s97
      %p106 = scmp.eq.s32.totalorder %s23, 0
      %p107 = por %p105, %p106
      %p108 = scmp.ne.s32.totalorder %s96, %s97
      %p109 = scmp.eq.s32.totalorder %s24, 1
      %p110 = por %p108, %p109
      %p112 = scmp.ne.s32.totalorder %s97, %s111
      %p113 = scmp.eq.s32.totalorder %s24, 0
      %p114 = por %p112, %p113
      %s116 = sadd.s32 %s115, 1
      %p119 = scmp.eq.s32.totalorder %s18, 1
      %p120 = scmp.ne.s32.totalorder %s115, %s117
      %p121 = scmp.eq.s32.totalorder %s18, 0
      %p122 = por %p120, %p121
      %p123 = scmp.ne.s32.totalorder %s115, %s117
      %p124 = scmp.eq.s32.totalorder %s23, 1
      %p125 = por %p123, %p124
      %p126 = scmp.ne.s32.totalorder %s117, %s118
      %p127 = scmp.eq.s32.totalorder %s23, 0
      %p128 = por %p126, %p127
      %p129 = scmp.ne.s32.totalorder %s117, %s118
      %p130 = scmp.eq.s32.totalorder %s24, 1
      %p131 = por %p129, %p130
      %p133 = scmp.ne.s32.totalorder %s118, %s132
      %p134 = scmp.eq.s32.totalorder %s24, 0
      %p135 = por %p133, %p134
      %s137 = sadd.s32 %s136, 1
      %p140 = scmp.eq.s32.totalorder %s18, 1
      %p141 = scmp.ne.s32.totalorder %s136, %s138
      %p142 = scmp.eq.s32.totalorder %s18, 0
      %p143 = por %p141, %p142
      %p144 = scmp.ne.s32.totalorder %s136, %s138
      %p145 = scmp.eq.s32.totalorder %s23, 1
      %p146 = por %p144, %p145
      %p147 = scmp.ne.s32.totalorder %s138, %s139
      %p148 = scmp.eq.s32.totalorder %s23, 0
      %p149 = por %p147, %p148
      %p150 = scmp.ne.s32.totalorder %s138, %s139
      %p151 = scmp.eq.s32.totalorder %s24, 1
      %p152 = por %p150, %p151
      %p154 = scmp.ne.s32.totalorder %s139, %s153
      %p155 = scmp.eq.s32.totalorder %s24, 0
      %p156 = por %p154, %p155
      %s158 = sadd.s32 %s157, 1
      %p161 = scmp.eq.s32.totalorder %s18, 1
      %p162 = scmp.ne.s32.totalorder %s157, %s159
      %p163 = scmp.eq.s32.totalorder %s18, 0
      %p164 = por %p162, %p163
      %p165 = scmp.ne.s32.totalorder %s157, %s159
      %p166 = scmp.eq.s32.totalorder %s23, 1
      %p167 = por %p165, %p166
      %p168 = scmp.ne.s32.totalorder %s159, %s160
      %p169 = scmp.eq.s32.totalorder %s23, 0
      %p170 = por %p168, %p169
      %p171 = scmp.ne.s32.totalorder %s159, %s160
      %p172 = scmp.eq.s32.totalorder %s24, 1
      %p173 = por %p171, %p172
      %p175 = scmp.ne.s32.totalorder %s160, %s174
      %p176 = scmp.eq.s32.totalorder %s24, 0
      %p177 = por %p175, %p176
      %s178 = ssub.s32 %s18, %s25
      %p179 = scmp.eq.s32.totalorder %s178, 0
      %s181 = sadd.s32 %s180, 1
      %s182 = scalar_select %p179, %s180, %s181
      %p185 = pneg %p179
      %p186 = scmp.eq.s32.totalorder %s18, 1
      %p187 = por %p185, %p186
      %p188 = scmp.ne.s32.totalorder %s180, %s183
      %p189 = scmp.eq.s32.totalorder %s18, 0
      %p190 = por %p188, %p189
      %p191 = scmp.ne.s32.totalorder %s180, %s183
      %p192 = scmp.eq.s32.totalorder %s23, 1
      %p193 = por %p191, %p192
      %p194 = scmp.ne.s32.totalorder %s183, %s184
      %p195 = scmp.eq.s32.totalorder %s23, 0
      %p196 = por %p194, %p195
      %p197 = scmp.ne.s32.totalorder %s183, %s184
      %p198 = scmp.eq.s32.totalorder %s24, 1
      %p199 = por %p197, %p198
      %p201 = scmp.ne.s32.totalorder %s184, %s200
      %p202 = scmp.eq.s32.totalorder %s24, 0
      %p203 = por %p201, %p202
      %p204 = scmp.le.s32.totalorder 1, %s18
      %p205 = scmp.lt.s32.totalorder %s18, 3
      %p206 = pnand %p204, %p205
      %p207 = pneg %p206
      // Predicated region
      $region9: #{tpu_custom_call.1} parent=5 // pred_check
        _
      $region10: #{tpu_custom_call.1} parent=5 // pred_check_branch
        %209 = sbr.rel (%p206) target = $region12
      $region11: #{tpu_custom_call.1} parent=5 // pred_region
        %s210 = ssub.s32 %s18, 1
        // Predicated region
        $region13: #{tpu_custom_call.1} parent=11 // pred_check
          %p211 = pneg %p65
        $region14: #{tpu_custom_call.1} parent=11 // pred_check_branch
          %213 = sbr.rel (%p211) target = $region16
        $region15: #{tpu_custom_call.1} parent=11 // pred_region
          _
        $region16: #{tpu_custom_call.1} parent=11 // pred_fallthru
          _
        // Predicated region
        $region17: #{tpu_custom_call.1} parent=11 // pred_check
          %p214 = pneg %p86
        $region18: #{tpu_custom_call.1} parent=11 // pred_check_branch
          %216 = sbr.rel (%p214) target = $region20
        $region19: #{tpu_custom_call.1} parent=11 // pred_region
          _
        $region20: #{tpu_custom_call.1} parent=11 // pred_fallthru
          _
        // Predicated region
        $region21: #{tpu_custom_call.1} parent=11 // pred_check
          %p217 = pneg %p107
        $region22: #{tpu_custom_call.1} parent=11 // pred_check_branch
          %219 = sbr.rel (%p217) target = $region24
        $region23: #{tpu_custom_call.1} parent=11 // pred_region
          _
        $region24: #{tpu_custom_call.1} parent=11 // pred_fallthru
          _
        // Predicated region
        $region25: #{tpu_custom_call.1} parent=11 // pred_check
          %p220 = pneg %p128
        $region26: #{tpu_custom_call.1} parent=11 // pred_check_branch
          %222 = sbr.rel (%p220) target = $region28
        $region27: #{tpu_custom_call.1} parent=11 // pred_region
          _
        $region28: #{tpu_custom_call.1} parent=11 // pred_fallthru
          _
        // Predicated region
        $region29: #{tpu_custom_call.1} parent=11 // pred_check
          %p223 = pneg %p149
        $region30: #{tpu_custom_call.1} parent=11 // pred_check_branch
          %225 = sbr.rel (%p223) target = $region32
        $region31: #{tpu_custom_call.1} parent=11 // pred_region
          _
        $region32: #{tpu_custom_call.1} parent=11 // pred_fallthru
          _
        // Predicated region
        $region33: #{tpu_custom_call.1} parent=11 // pred_check
          %p226 = pneg %p170
        $region34: #{tpu_custom_call.1} parent=11 // pred_check_branch
          %228 = sbr.rel (%p226) target = $region36
        $region35: #{tpu_custom_call.1} parent=11 // pred_region
          _
        $region36: #{tpu_custom_call.1} parent=11 // pred_fallthru
          _
      $region12: #{tpu_custom_call.1} parent=5 // pred_fallthru
        _
      %p229 = scmp.lt.s32.totalorder %s18, 2
      // Predicated region
      $region37: #{tpu_custom_call.1} parent=5 // pred_check
        %p230 = pneg %p229
      $region38: #{tpu_custom_call.1} parent=5 // pred_check_branch
        %232 = sbr.rel (%p230) target = $region40
      $region39: #{tpu_custom_call.1} parent=5 // pred_region
        // Predicated region
        $region41: #{tpu_custom_call.1} parent=39 // pred_check
          %p233 = pneg %p38
        $region42: #{tpu_custom_call.1} parent=39 // pred_check_branch
          %235 = sbr.rel (%p233) target = $region44
        $region43: #{tpu_custom_call.1} parent=39 // pred_region
          %s236 = smul.u32 64, %s18
          %s237 = ssub.s32 80, %s236
          %p238 = scmp.lt.s32.totalorder %s237, 64
          %s239 = scalar_select %p238, %s237, 64
          %s240 = smul.u32 128, %s239
          %p241 = scmp.lt.s32.totalorder %s236, 79
          %s242 = scalar_select %p241, %s236, 79
          %s243 = smul.addr %s242, 8
          %s244 = scalar_lea.vmem %s0, %s243
          %s245 = smul.u32 64, %s18
          %s246 = ssub.s32 80, %s245
          %p247 = scmp.lt.s32.totalorder %s246, 64
          %s248 = scalar_select %p247, %s246, 64
          %s249 = smul.u32 128, %s248
        $region44: #{tpu_custom_call.1} parent=39 // pred_fallthru
          _
      $region40: #{tpu_custom_call.1} parent=5 // pred_fallthru
        _
      %p250 = scmp.le.s32.totalorder 1, %s18
      %p251 = scmp.lt.s32.totalorder %s18, 3
      %p252 = pnand %p250, %p251
      %p253 = pneg %p252
      // Predicated region
      $region45: #{tpu_custom_call.1} parent=5 // pred_check
        _
      $region46: #{tpu_custom_call.1} parent=5 // pred_check_branch
        %255 = sbr.rel (%p252) target = $region48
      $region47: #{tpu_custom_call.1} parent=5 // pred_region
        %s256 = ssub.s32 %s18, 1
        %s257 = smul.u32 64, %s23
        %s258 = ssub.s32 80, %s257
        %p259 = scmp.lt.s32.totalorder %s258, 64
        %s260 = scalar_select %p259, %s258, 64
        %s261 = smul.u32 128, %s260
        %p262 = scmp.lt.s32.totalorder %s257, 79
        %s263 = scalar_select %p262, %s257, 79
        %s264 = smul.addr %s263, 8
        %s265 = scalar_lea.vmem %s0, %s264
        %p266 = pneg %p44
        %p267 = pneg %p41
        %p268 = pneg %p65
        %p269 = pneg %p62
        %p270 = pneg %p86
        %p271 = pneg %p83
        %p272 = pneg %p107
        %p273 = pneg %p104
        %p274 = pneg %p128
        %p275 = pneg %p125
        %p276 = pneg %p149
        %p277 = pneg %p146
        %p278 = pneg %p170
        %p279 = pneg %p167
        %p280 = pneg %p196
        %p281 = pneg %p193
        %s282 = sand.u32 %s183, 1
        %s283 = scalar_lea.sflag [#allocation4], %s282
        %s284 = sand.u32 %s183, 1
        %s285 = smul.addr %s284, 4
        %s286 = scalar_lea.vmem [#allocation3], %s285
        %s287 = smul.u32 64, %s23
        %s288 = ssub.s32 80, %s287
        %p289 = scmp.lt.s32.totalorder %s288, 64
        %s290 = scalar_select %p289, %s288, 64
        %s291 = smul.u32 128, %s290
        %p292 = scmp.lt.s32.totalorder %s287, 79
        %s293 = scalar_select %p292, %s287, 79
        %s294 = smul.addr %s293, 8
        %s295 = scalar_lea.vmem %s0, %s294
        %s296 = smul.u32 64, %s23
        %s297 = ssub.s32 80, %s296
        %p298 = scmp.lt.s32.totalorder %s297, 64
        %s299 = scalar_select %p298, %s297, 64
        %s300 = smul.u32 128, %s299
        %s301 = smul.u32 4, %s23
        %s302 = ssub.s32 5, %s301
        %p303 = scmp.lt.s32.totalorder %s302, 4
        %s304 = scalar_select %p303, %s302, 4
        %s305 = smul.u32 16, %s304
        %v307 = vld [vmem:[%s1] sm:$0xf]
        %v308 = vld [vmem:[%s1 + $0x4] sm:$0xf]
        %v309 = vld [vmem:[%s1 + $0x8] sm:$0xf]
        %v310 = vld [vmem:[%s1 + $0xc] sm:$0xf]
        %v311 = vld [vmem:[%s3] sm:$0xf]
        %v312 = vld [vmem:[%s3 + $0x4] sm:$0xf]
        %v313 = vld [vmem:[%s3 + $0x8] sm:$0xf]
        %v314 = vld [vmem:[%s3 + $0xc] sm:$0xf]
        %v315 = vld [vmem:[%s2] sm:$0xff]
        %v316 = vld [vmem:[%s2 + $0x8] sm:$0xff]
        %v317 = vld [vmem:[%s2 + $0x10] sm:$0xff]
        %v318 = vld [vmem:[%s2 + $0x18] sm:$0xff]
        %v319 = vld [vmem:[%s4] sm:$0xff]
        %v320 = vld [vmem:[%s4 + $0x8] sm:$0xff]
        %v321 = vld [vmem:[%s4 + $0x10] sm:$0xff]
        %v322 = vld [vmem:[%s4 + $0x18] sm:$0xff]
        %v323 = vld [vmem:[%s5] sm:$0xff]
        %v324 = vld [vmem:[%s5 + $0x8] sm:$0xff]
        %v325 = vld [vmem:[%s5 + $0x10] sm:$0xff]
        %v326 = vld [vmem:[%s5 + $0x18] sm:$0xff]
        %v327 = vld [vmem:[#allocation2] sm:$0x1]
        %v328 = vld [vmem:[%s295] sm:$0xff]
        %v329 = vld [vmem:[%s295 + $0x8] sm:$0xff]
        %v330 = vld [vmem:[%s295 + $0x10] sm:$0xff]
        %v331 = vld [vmem:[%s295 + $0x18] sm:$0xff]
        %v332 = vld [vmem:[%s295 + $0x20] sm:$0xff]
        %v333 = vld [vmem:[%s295 + $0x28] sm:$0xff]
        %v334 = vld [vmem:[%s295 + $0x30] sm:$0xff]
        %v335 = vld [vmem:[%s295 + $0x38] sm:$0xff]
        %v336 = vld [vmem:[%s295 + $0x40] sm:$0xff]
        %v337 = vld [vmem:[%s295 + $0x48] sm:$0xff]
        %v338 = vld [vmem:[%s295 + $0x50] sm:$0xff]
        %v339 = vld [vmem:[%s295 + $0x58] sm:$0xff]
        %v340 = vld [vmem:[%s295 + $0x60] sm:$0xff]
        %v341 = vld [vmem:[%s295 + $0x68] sm:$0xff]
        %v342 = vld [vmem:[%s295 + $0x70] sm:$0xff]
        %v343 = vld [vmem:[%s295 + $0x78] sm:$0xff]
        %v344 = vld [vmem:[%s295 + $0x80] sm:$0xff]
        %v345 = vld [vmem:[%s295 + $0x88] sm:$0xff]
        %v346 = vld [vmem:[%s295 + $0x90] sm:$0xff]
        %v347 = vld [vmem:[%s295 + $0x98] sm:$0xff]
        %v348 = vld [vmem:[%s295 + $0xa0] sm:$0xff]
        %v349 = vld [vmem:[%s295 + $0xa8] sm:$0xff]
        %v350 = vld [vmem:[%s295 + $0xb0] sm:$0xff]
        %v351 = vld [vmem:[%s295 + $0xb8] sm:$0xff]
        %v352 = vld [vmem:[%s295 + $0xc0] sm:$0xff]
        %v353 = vld [vmem:[%s295 + $0xc8] sm:$0xff]
        %v354 = vld [vmem:[%s295 + $0xd0] sm:$0xff]
        %v355 = vld [vmem:[%s295 + $0xd8] sm:$0xff]
        %v356 = vld [vmem:[%s295 + $0xe0] sm:$0xff]
        %v357 = vld [vmem:[%s295 + $0xe8] sm:$0xff]
        %v358 = vld [vmem:[%s295 + $0xf0] sm:$0xff]
        %v359 = vld [vmem:[%s295 + $0xf8] sm:$0xff]
        %v360 = vpack.c.bf16 %v329, %v328
        %v361 = vpack.c.bf16 %v331, %v330
        %v362 = vpack.c.bf16 %v333, %v332
        %v363 = vpack.c.bf16 %v335, %v334
        %v364 = vpack.c.bf16 %v337, %v336
        %v365 = vpack.c.bf16 %v339, %v338
        %v366 = vpack.c.bf16 %v341, %v340
        %v367 = vpack.c.bf16 %v343, %v342
        %v368 = vpack.c.bf16 %v345, %v344
        %v369 = vpack.c.bf16 %v347, %v346
        %v370 = vpack.c.bf16 %v349, %v348
        %v371 = vpack.c.bf16 %v351, %v350
        %v372 = vpack.c.bf16 %v353, %v352
        %v373 = vpack.c.bf16 %v355, %v354
        %v374 = vpack.c.bf16 %v357, %v356
        %v375 = vpack.c.bf16 %v359, %v358
        %377 = vset.pattern.permute.xlu0 0
        %378 = vperm.xlu0 %377, %v315
        %v379 = vpop.permute.xlu0 %378
        %382 = vset.pattern.permute.xlu0 0
        %383 = vperm.xlu0 %382, %v316
        %v384 = vpop.permute.xlu0 %383
        %387 = vset.pattern.permute.xlu0 0
        %388 = vperm.xlu0 %387, %v317
        %v389 = vpop.permute.xlu0 %388
        %392 = vset.pattern.permute.xlu0 0
        %393 = vperm.xlu0 %392, %v318
        %v394 = vpop.permute.xlu0 %393
        %v400 = vunpack.c.l.b16 %v307
        %v401 = vunpack.c.l.b16 %v308
        %v402 = vunpack.c.l.b16 %v309
        %v403 = vunpack.c.l.b16 %v310
        %v404 = vpack.c.b16 %v401, %v400
        %v405 = vpack.c.b16 %v403, %v402
        %vm406 = vcmask 89088
        %v408 = vsel %vm406, %v404, 0
        %v411 = vsel %vm406, %v405, 0
        %v414 = vsel %vm406, %v360, 0
        %v417 = vsel %vm406, %v361, 0
        %v420 = vsel %vm406, %v362, 0
        %v423 = vsel %vm406, %v363, 0
        %v426 = vsel %vm406, %v364, 0
        %v429 = vsel %vm406, %v365, 0
        %v432 = vsel %vm406, %v366, 0
        %v435 = vsel %vm406, %v367, 0
        %v438 = vsel %vm406, %v368, 0
        %v441 = vsel %vm406, %v369, 0
        %v444 = vsel %vm406, %v370, 0
        %v447 = vsel %vm406, %v371, 0
        %v450 = vsel %vm406, %v372, 0
        %v453 = vsel %vm406, %v373, 0
        %v456 = vsel %vm406, %v374, 0
        %v459 = vsel %vm406, %v375, 0
        %461 = vmatprep.subr.bf16.mxu0 0
        %462 = vmatpush1.bf16.xpose.msra.mxu0 %v414
        %463 = vmatprep.subr.bf16.mxu0 0
        %464 = vmatpush1.bf16.xpose.msra.mxu0 %v417
        %465 = vmatprep.subr.bf16.mxu0 0
        %466 = vmatpush1.bf16.xpose.msra.mxu0 %v420
        %467 = vmatprep.subr.bf16.mxu0 0
        %468 = vmatpush1.bf16.xpose.msra.mxu0 %v423
        %469 = vmatprep.subr.bf16.mxu0 0
        %470 = vmatpush1.bf16.xpose.msra.mxu0 %v426
        %471 = vmatprep.subr.bf16.mxu0 0
        %472 = vmatpush1.bf16.xpose.msra.mxu0 %v429
        %473 = vmatprep.subr.bf16.mxu0 0
        %474 = vmatpush1.bf16.xpose.msra.mxu0 %v432
        %475 = vmatprep.subr.bf16.mxu0 0
        %476 = vmatpush1.bf16.xpose.msra.mxu0 %v435
        %477 = vmatprep.subr.bf16.mxu0 0
        %478 = vmatpush1.bf16.xpose.msra.mxu0 %v438
        %479 = vmatprep.subr.bf16.mxu0 0
        %480 = vmatpush1.bf16.xpose.msra.mxu0 %v441
        %481 = vmatprep.subr.bf16.mxu0 0
        %482 = vmatpush1.bf16.xpose.msra.mxu0 %v444
        %483 = vmatprep.subr.bf16.mxu0 0
        %484 = vmatpush1.bf16.xpose.msra.mxu0 %v447
        %485 = vmatprep.subr.bf16.mxu0 0
        %486 = vmatpush1.bf16.xpose.msra.mxu0 %v450
        %487 = vmatprep.subr.bf16.mxu0 0
        %488 = vmatpush1.bf16.xpose.msra.mxu0 %v453
        %489 = vmatprep.subr.bf16.mxu0 0
        %490 = vmatpush1.bf16.xpose.msra.mxu0 %v456
        %491 = vmatprep.subr.bf16.mxu0 0
        %492 = vmatpush1.bf16.xpose.msra.mxu0 %v459
        %493 = vmatprep.mubr.bf16.mxu0 0
        %494 = vmatmul.mubr.bf16.gmra.mrb[0].mxu0 %v408
        %v495 = vpop.f32.mrb[0].mxu0
        %v496 = vadd.f32 %v379, %v495
        %v497 = vpop.f32.mrb[0].mxu0
        %v498 = vadd.f32 %v379, %v497
        %v499 = vpop.f32.mrb[0].mxu0
        %v500 = vadd.f32 %v384, %v499
        %v501 = vpop.f32.mrb[0].mxu0
        %v502 = vadd.f32 %v384, %v501
        %503 = vmatprep.mubr.bf16.mxu0 0
        %504 = vmatmul.mubr.bf16.gmra.mrb[0].mxu0 %v411
        %v505 = vpop.f32.mrb[0].mxu0
        %v506 = vadd.f32 %v389, %v505
        %v507 = vpop.f32.mrb[0].mxu0
        %v508 = vadd.f32 %v389, %v507
        %v509 = vpop.f32.mrb[0].mxu0
        %v510 = vadd.f32 %v394, %v509
        %v511 = vpop.f32.mrb[0].mxu0
        %v512 = vadd.f32 %v394, %v511
        %513 = vdwg.mxu0
        %v514 = vmax.f32 %v496, 0.0
        %v515 = vmax.f32 %v498, 0.0
        %v516 = vmax.f32 %v500, 0.0
        %v517 = vmax.f32 %v502, 0.0
        %v518 = vmax.f32 %v506, 0.0
        %v519 = vmax.f32 %v508, 0.0
        %v520 = vmax.f32 %v510, 0.0
        %v521 = vmax.f32 %v512, 0.0
        %v522 = vpack.c.bf16 %v516, %v514
        %v523 = vpack.c.bf16 %v517, %v515
        %v524 = vpack.c.bf16 %v520, %v518
        %v525 = vpack.c.bf16 %v521, %v519
        %527 = vset.pattern.permute.xlu0 0
        %528 = vperm.xlu0 %527, %v319
        %v529 = vpop.permute.xlu0 %528
        %532 = vset.pattern.permute.xlu0 0
        %533 = vperm.xlu0 %532, %v320
        %v534 = vpop.permute.xlu0 %533
        %537 = vset.pattern.permute.xlu0 0
        %538 = vperm.xlu0 %537, %v321
        %v539 = vpop.permute.xlu0 %538
        %542 = vset.pattern.permute.xlu0 0
        %543 = vperm.xlu0 %542, %v322
        %v544 = vpop.permute.xlu0 %543
        %v550 = vunpack.c.l.b16 %v311
        %v551 = vunpack.c.l.b16 %v312
        %v552 = vunpack.c.l.b16 %v313
        %v553 = vunpack.c.l.b16 %v314
        %v554 = vpack.c.b16 %v551, %v550
        %v555 = vpack.c.b16 %v553, %v552
        %vm556 = vcmask 261120
        %v558 = vsel %vm556, %v554, 0
        %v561 = vsel %vm556, %v555, 0
        %563 = vmatprep.subr.bf16.mxu0 %v523
        %564 = vmatpush1.bf16.msra.mxu0 %v522
        %565 = vmatprep.subr.bf16.mxu0 %v525
        %566 = vmatpush1.bf16.msra.mxu0 %v524
        %567 = vmatprep.subr.bf16.mxu0 0
        %568 = vmatpush1.bf16.msra.mxu0 0
        %569 = vmatprep.subr.bf16.mxu0 0
        %570 = vmatpush1.bf16.msra.mxu0 0
        %571 = vmatprep.subr.bf16.mxu0 0
        %572 = vmatpush1.bf16.msra.mxu0 0
        %573 = vmatprep.subr.bf16.mxu0 0
        %574 = vmatpush1.bf16.msra.mxu0 0
        %575 = vmatprep.subr.bf16.mxu0 0
        %576 = vmatpush1.bf16.msra.mxu0 0
        %577 = vmatprep.subr.bf16.mxu0 0
        %578 = vmatpush1.bf16.msra.mxu0 0
        %579 = vmatprep.subr.bf16.mxu0 0
        %580 = vmatpush1.bf16.msra.mxu0 0
        %581 = vmatprep.subr.bf16.mxu0 0
        %582 = vmatpush1.bf16.msra.mxu0 0
        %583 = vmatprep.subr.bf16.mxu0 0
        %584 = vmatpush1.bf16.msra.mxu0 0
        %585 = vmatprep.subr.bf16.mxu0 0
        %586 = vmatpush1.bf16.msra.mxu0 0
        %587 = vmatprep.subr.bf16.mxu0 0
        %588 = vmatpush1.bf16.msra.mxu0 0
        %589 = vmatprep.subr.bf16.mxu0 0
        %590 = vmatpush1.bf16.msra.mxu0 0
        %591 = vmatprep.subr.bf16.mxu0 0
        %592 = vmatpush1.bf16.msra.mxu0 0
        %593 = vmatprep.subr.bf16.mxu0 0
        %594 = vmatpush1.bf16.msra.mxu0 0
        %595 = vmatprep.mubr.bf16.mxu0 0
        %596 = vmatmul.mubr.bf16.gmra.mrb[0].mxu0 %v558
        %v597 = vpop.f32.mrb[0].mxu0
        %v598 = vadd.f32 %v529, %v597
        %v599 = vpop.f32.mrb[0].mxu0
        %v600 = vadd.f32 %v529, %v599
        %v601 = vpop.f32.mrb[0].mxu0
        %v602 = vadd.f32 %v534, %v601
        %v603 = vpop.f32.mrb[0].mxu0
        %v604 = vadd.f32 %v534, %v603
        %605 = vmatprep.mubr.bf16.mxu0 0
        %606 = vmatmul.mubr.bf16.gmra.mrb[0].mxu0 %v561
        %v607 = vpop.f32.mrb[0].mxu0
        %v608 = vadd.f32 %v539, %v607
        %v609 = vpop.f32.mrb[0].mxu0
        %v610 = vadd.f32 %v539, %v609
        %v611 = vpop.f32.mrb[0].mxu0
        %v612 = vadd.f32 %v544, %v611
        %v613 = vpop.f32.mrb[0].mxu0
        %v614 = vadd.f32 %v544, %v613
        %615 = vdwg.mxu0
        %v616 = vmax.f32 %v598, 0.0
        %v617 = vmax.f32 %v600, 0.0
        %v618 = vmax.f32 %v602, 0.0
        %v619 = vmax.f32 %v604, 0.0
        %v620 = vmax.f32 %v608, 0.0
        %v621 = vmax.f32 %v610, 0.0
        %v622 = vmax.f32 %v612, 0.0
        %v623 = vmax.f32 %v614, 0.0
        %625 = vset.pattern.permute.xlu0 0
        %626 = vperm.xlu0 %625, %v323
        %v627 = vpop.permute.xlu0 %626
        %630 = vset.pattern.permute.xlu0 0
        %631 = vperm.xlu0 %630, %v324
        %v632 = vpop.permute.xlu0 %631
        %635 = vset.pattern.permute.xlu0 0
        %636 = vperm.xlu0 %635, %v325
        %v637 = vpop.permute.xlu0 %636
        %640 = vset.pattern.permute.xlu0 0
        %641 = vperm.xlu0 %640, %v326
        %v642 = vpop.permute.xlu0 %641
        %v644 = vmul.f32 %v616, %v627
        %v645 = vmul.f32 %v617, %v627
        %v646 = vmul.f32 %v618, %v632
        %v647 = vmul.f32 %v619, %v632
        %v648 = vmul.f32 %v620, %v637
        %v649 = vmul.f32 %v621, %v637
        %v650 = vmul.f32 %v622, %v642
        %v651 = vmul.f32 %v623, %v642
        %v652 = vadd.f32 %v644, %v646
        %v653 = vadd.f32 %v652, %v648
        %v654 = vadd.f32 %v653, %v650
        %v655 = vrot.slane %v654, 4
        %v656 = vadd.f32 %v654, %v655
        %v657 = vrot.slane %v656, 2
        %v658 = vadd.f32 %v656, %v657
        %v659 = vrot.slane %v658, 1
        %v660 = vadd.f32 %v658, %v659
        %v661 = vadd.f32 %v645, %v647
        %v662 = vadd.f32 %v661, %v649
        %v663 = vadd.f32 %v662, %v651
        %v664 = vrot.slane %v663, 4
        %v665 = vadd.f32 %v663, %v664
        %v666 = vrot.slane %v665, 2
        %v667 = vadd.f32 %v665, %v666
        %v668 = vrot.slane %v667, 1
        %v669 = vadd.f32 %v667, %v668
        %671 = vset.pattern.permute.xlu0 0
        %672 = vperm.xlu0 %671, %v327
        %v673 = vpop.permute.xlu0 %672
        %v675 = vlaneseq
        %v676 = vshrl.u32 %v675, 7
        %v677 = vsub.s32 0, %v676
        %v678 = vrot.slane %v673, %v677
        %v679 = vadd.f32 %v660, %v678
        %v680 = vadd.f32 %v669, %v678
        %v681 = vsub.f32 0.0, %v679
        %v682 = vsub.f32 0.0, %v680
        %v683 = vmul.f32 %v681, 1.442695
        %v684 = vpow.pop %v683
        %v685 = vmul.f32 %v682, 1.442695
        %v686 = vpow.pop %v685
        %v687 = vadd.f32 %v684, 1.0
        %v688 = vadd.f32 %v686, 1.0
        %v689 = vrcp.pop %v687
        %v690 = vrcp.pop %v688
        %v693 = vcombine.low %v689, %v690
        %v695 = vunpack.c.l.s4 1966171168
        %v696 = vunpack.c.0.s8 %v695
        %v697 = vlaneseq
        %v698 = vshrl.u32 %v697, 7
        %v699 = vsub.s32 %v696, %v698
        %v700 = vrot.slane %v693, %v699
        %v702 = vunpack.c.l.s4 1966171168
        %v703 = vunpack.c.0.s8 %v702
        %v704 = vlaneseq
        %v705 = vshrl.u32 %v704, 7
        %v706 = vsub.s32 %v703, %v705
        %v707 = vrot.slane %v700, %v706
        %v709 = vlaneseq
        %vm710 = vcmp.ge.s32.totalorder %v709, 0
        %vm711 = vcmp.lt.s32.totalorder %v709, 256
        %vm712 = vmand %vm710, %vm711
        %713 = vst.msk [vmem:[%s286] sm:$0x3] %vm712, %v707
        %v714 = vld [vmem:[%s295 + $0x100] sm:$0xff]
        %v715 = vld [vmem:[%s295 + $0x108] sm:$0xff]
        %v716 = vld [vmem:[%s295 + $0x110] sm:$0xff]
        %v717 = vld [vmem:[%s295 + $0x118] sm:$0xff]
        %v718 = vld [vmem:[%s295 + $0x120] sm:$0xff]
        %v719 = vld [vmem:[%s295 + $0x128] sm:$0xff]
        %v720 = vld [vmem:[%s295 + $0x130] sm:$0xff]
        %v721 = vld [vmem:[%s295 + $0x138] sm:$0xff]
        %v722 = vld [vmem:[%s295 + $0x140] sm:$0xff]
        %v723 = vld [vmem:[%s295 + $0x148] sm:$0xff]
        %v724 = vld [vmem:[%s295 + $0x150] sm:$0xff]
        %v725 = vld [vmem:[%s295 + $0x158] sm:$0xff]
        %v726 = vld [vmem:[%s295 + $0x160] sm:$0xff]
        %v727 = vld [vmem:[%s295 + $0x168] sm:$0xff]
        %v728 = vld [vmem:[%s295 + $0x170] sm:$0xff]
        %v729 = vld [vmem:[%s295 + $0x178] sm:$0xff]
        %v730 = vld [vmem:[%s295 + $0x180] sm:$0xff]
        %v731 = vld [vmem:[%s295 + $0x188] sm:$0xff]
        %v732 = vld [vmem:[%s295 + $0x190] sm:$0xff]
        %v733 = vld [vmem:[%s295 + $0x198] sm:$0xff]
        %v734 = vld [vmem:[%s295 + $0x1a0] sm:$0xff]
        %v735 = vld [vmem:[%s295 + $0x1a8] sm:$0xff]
        %v736 = vld [vmem:[%s295 + $0x1b0] sm:$0xff]
        %v737 = vld [vmem:[%s295 + $0x1b8] sm:$0xff]
        %v738 = vld [vmem:[%s295 + $0x1c0] sm:$0xff]
        %v739 = vld [vmem:[%s295 + $0x1c8] sm:$0xff]
        %v740 = vld [vmem:[%s295 + $0x1d0] sm:$0xff]
        %v741 = vld [vmem:[%s295 + $0x1d8] sm:$0xff]
        %v742 = vld [vmem:[%s295 + $0x1e0] sm:$0xff]
        %v743 = vld [vmem:[%s295 + $0x1e8] sm:$0xff]
        %v744 = vld [vmem:[%s295 + $0x1f0] sm:$0xff]
        %v745 = vld [vmem:[%s295 + $0x1f8] sm:$0xff]
        %v746 = vpack.c.bf16 %v715, %v714
        %v747 = vpack.c.bf16 %v717, %v716
        %v748 = vpack.c.bf16 %v719, %v718
        %v749 = vpack.c.bf16 %v721, %v720
        %v750 = vpack.c.bf16 %v723, %v722
        %v751 = vpack.c.bf16 %v725, %v724
        %v752 = vpack.c.bf16 %v727, %v726
        %v753 = vpack.c.bf16 %v729, %v728
        %v754 = vpack.c.bf16 %v731, %v730
        %v755 = vpack.c.bf16 %v733, %v732
        %v756 = vpack.c.bf16 %v735, %v734
        %v757 = vpack.c.bf16 %v737, %v736
        %v758 = vpack.c.bf16 %v739, %v738
        %v759 = vpack.c.bf16 %v741, %v740
        %v760 = vpack.c.bf16 %v743, %v742
        %v761 = vpack.c.bf16 %v745, %v744
        %v763 = vsel %vm406, %v746, 0
        %v766 = vsel %vm406, %v747, 0
        %v769 = vsel %vm406, %v748, 0
        %v772 = vsel %vm406, %v749, 0
        %v775 = vsel %vm406, %v750, 0
        %v778 = vsel %vm406, %v751, 0
        %v781 = vsel %vm406, %v752, 0
        %v784 = vsel %vm406, %v753, 0
        %v787 = vsel %vm406, %v754, 0
        %v790 = vsel %vm406, %v755, 0
        %v793 = vsel %vm406, %v756, 0
        %v796 = vsel %vm406, %v757, 0
        %v799 = vsel %vm406, %v758, 0
        %v802 = vsel %vm406, %v759, 0
        %v805 = vsel %vm406, %v760, 0
        %v808 = vsel %vm406, %v761, 0
        %810 = vmatprep.subr.bf16.mxu0 0
        %811 = vmatpush1.bf16.xpose.msra.mxu0 %v763
        %812 = vmatprep.subr.bf16.mxu0 0
        %813 = vmatpush1.bf16.xpose.msra.mxu0 %v766
        %814 = vmatprep.subr.bf16.mxu0 0
        %815 = vmatpush1.bf16.xpose.msra.mxu0 %v769
        %816 = vmatprep.subr.bf16.mxu0 0
        %817 = vmatpush1.bf16.xpose.msra.mxu0 %v772
        %818 = vmatprep.subr.bf16.mxu0 0
        %819 = vmatpush1.bf16.xpose.msra.mxu0 %v775
        %820 = vmatprep.subr.bf16.mxu0 0
        %821 = vmatpush1.bf16.xpose.msra.mxu0 %v778
        %822 = vmatprep.subr.bf16.mxu0 0
        %823 = vmatpush1.bf16.xpose.msra.mxu0 %v781
        %824 = vmatprep.subr.bf16.mxu0 0
        %825 = vmatpush1.bf16.xpose.msra.mxu0 %v784
        %826 = vmatprep.subr.bf16.mxu0 0
        %827 = vmatpush1.bf16.xpose.msra.mxu0 %v787
        %828 = vmatprep.subr.bf16.mxu0 0
        %829 = vmatpush1.bf16.xpose.msra.mxu0 %v790
        %830 = vmatprep.subr.bf16.mxu0 0
        %831 = vmatpush1.bf16.xpose.msra.mxu0 %v793
        %832 = vmatprep.subr.bf16.mxu0 0
        %833 = vmatpush1.bf16.xpose.msra.mxu0 %v796
        %834 = vmatprep.subr.bf16.mxu0 0
        %835 = vmatpush1.bf16.xpose.msra.mxu0 %v799
        %836 = vmatprep.subr.bf16.mxu0 0
        %837 = vmatpush1.bf16.xpose.msra.mxu0 %v802
        %838 = vmatprep.subr.bf16.mxu0 0
        %839 = vmatpush1.bf16.xpose.msra.mxu0 %v805
        %840 = vmatprep.subr.bf16.mxu0 0
        %841 = vmatpush1.bf16.xpose.msra.mxu0 %v808
        %842 = vmatprep.mubr.bf16.mxu0 0
        %843 = vmatmul.mubr.bf16.gmra.mrb[0].mxu0 %v408
        %v844 = vpop.f32.mrb[0].mxu0
        %v845 = vadd.f32 %v379, %v844
        %v846 = vpop.f32.mrb[0].mxu0
        %v847 = vadd.f32 %v379, %v846
        %v848 = vpop.f32.mrb[0].mxu0
        %v849 = vadd.f32 %v384, %v848
        %v850 = vpop.f32.mrb[0].mxu0
        %v851 = vadd.f32 %v384, %v850
        %852 = vmatprep.mubr.bf16.mxu0 0
        %853 = vmatmul.mubr.bf16.gmra.mrb[0].mxu0 %v411
        %v854 = vpop.f32.mrb[0].mxu0
        %v855 = vadd.f32 %v389, %v854
        %v856 = vpop.f32.mrb[0].mxu0
        %v857 = vadd.f32 %v389, %v856
        %v858 = vpop.f32.mrb[0].mxu0
        %v859 = vadd.f32 %v394, %v858
        %v860 = vpop.f32.mrb[0].mxu0
        %v861 = vadd.f32 %v394, %v860
        %862 = vdwg.mxu0
        %v863 = vmax.f32 %v845, 0.0
        %v864 = vmax.f32 %v847, 0.0
        %v865 = vmax.f32 %v849, 0.0
        %v866 = vmax.f32 %v851, 0.0
        %v867 = vmax.f32 %v855, 0.0
        %v868 = vmax.f32 %v857, 0.0
        %v869 = vmax.f32 %v859, 0.0
        %v870 = vmax.f32 %v861, 0.0
        %v871 = vpack.c.bf16 %v865, %v863
        %v872 = vpack.c.bf16 %v866, %v864
        %v873 = vpack.c.bf16 %v869, %v867
        %v874 = vpack.c.bf16 %v870, %v868
        %875 = vmatprep.subr.bf16.mxu0 %v872
        %876 = vmatpush1.bf16.msra.mxu0 %v871
        %877 = vmatprep.subr.bf16.mxu0 %v874
        %878 = vmatpush1.bf16.msra.mxu0 %v873
        %879 = vmatprep.subr.bf16.mxu0 0
        %880 = vmatpush1.bf16.msra.mxu0 0
        %881 = vmatprep.subr.bf16.mxu0 0
        %882 = vmatpush1.bf16.msra.mxu0 0
        %883 = vmatprep.subr.bf16.mxu0 0
        %884 = vmatpush1.bf16.msra.mxu0 0
        %885 = vmatprep.subr.bf16.mxu0 0
        %886 = vmatpush1.bf16.msra.mxu0 0
        %887 = vmatprep.subr.bf16.mxu0 0
        %888 = vmatpush1.bf16.msra.mxu0 0
        %889 = vmatprep.subr.bf16.mxu0 0
        %890 = vmatpush1.bf16.msra.mxu0 0
        %891 = vmatprep.subr.bf16.mxu0 0
        %892 = vmatpush1.bf16.msra.mxu0 0
        %893 = vmatprep.subr.bf16.mxu0 0
        %894 = vmatpush1.bf16.msra.mxu0 0
        %895 = vmatprep.subr.bf16.mxu0 0
        %896 = vmatpush1.bf16.msra.mxu0 0
        %897 = vmatprep.subr.bf16.mxu0 0
        %898 = vmatpush1.bf16.msra.mxu0 0
        %899 = vmatprep.subr.bf16.mxu0 0
        %900 = vmatpush1.bf16.msra.mxu0 0
        %901 = vmatprep.subr.bf16.mxu0 0
        %902 = vmatpush1.bf16.msra.mxu0 0
        %903 = vmatprep.subr.bf16.mxu0 0
        %904 = vmatpush1.bf16.msra.mxu0 0
        %905 = vmatprep.subr.bf16.mxu0 0
        %906 = vmatpush1.bf16.msra.mxu0 0
        %907 = vmatprep.mubr.bf16.mxu0 0
        %908 = vmatmul.mubr.bf16.gmra.mrb[0].mxu0 %v558
        %v909 = vpop.f32.mrb[0].mxu0
        %v910 = vadd.f32 %v529, %v909
        %v911 = vpop.f32.mrb[0].mxu0
        %v912 = vadd.f32 %v529, %v911
        %v913 = vpop.f32.mrb[0].mxu0
        %v914 = vadd.f32 %v534, %v913
        %v915 = vpop.f32.mrb[0].mxu0
        %v916 = vadd.f32 %v534, %v915
        %917 = vmatprep.mubr.bf16.mxu0 0
        %918 = vmatmul.mubr.bf16.gmra.mrb[0].mxu0 %v561
        %v919 = vpop.f32.mrb[0].mxu0
        %v920 = vadd.f32 %v539, %v919
        %v921 = vpop.f32.mrb[0].mxu0
        %v922 = vadd.f32 %v539, %v921
        %v923 = vpop.f32.mrb[0].mxu0
        %v924 = vadd.f32 %v544, %v923
        %v925 = vpop.f32.mrb[0].mxu0
        %v926 = vadd.f32 %v544, %v925
        %927 = vdwg.mxu0
        %v928 = vmax.f32 %v910, 0.0
        %v929 = vmax.f32 %v912, 0.0
        %v930 = vmax.f32 %v914, 0.0
        %v931 = vmax.f32 %v916, 0.0
        %v932 = vmax.f32 %v920, 0.0
        %v933 = vmax.f32 %v922, 0.0
        %v934 = vmax.f32 %v924, 0.0
        %v935 = vmax.f32 %v926, 0.0
        %v936 = vmul.f32 %v928, %v627
        %v937 = vmul.f32 %v929, %v627
        %v938 = vmul.f32 %v930, %v632
        %v939 = vmul.f32 %v931, %v632
        %v940 = vmul.f32 %v932, %v637
        %v941 = vmul.f32 %v933, %v637
        %v942 = vmul.f32 %v934, %v642
        %v943 = vmul.f32 %v935, %v642
        %v944 = vadd.f32 %v936, %v938
        %v945 = vadd.f32 %v944, %v940
        %v946 = vadd.f32 %v945, %v942
        %v947 = vrot.slane %v946, 4
        %v948 = vadd.f32 %v946, %v947
        %v949 = vrot.slane %v948, 2
        %v950 = vadd.f32 %v948, %v949
        %v951 = vrot.slane %v950, 1
        %v952 = vadd.f32 %v950, %v951
        %v953 = vadd.f32 %v937, %v939
        %v954 = vadd.f32 %v953, %v941
        %v955 = vadd.f32 %v954, %v943
        %v956 = vrot.slane %v955, 4
        %v957 = vadd.f32 %v955, %v956
        %v958 = vrot.slane %v957, 2
        %v959 = vadd.f32 %v957, %v958
        %v960 = vrot.slane %v959, 1
        %v961 = vadd.f32 %v959, %v960
        %v962 = vadd.f32 %v952, %v678
        %v963 = vadd.f32 %v961, %v678
        %v964 = vsub.f32 0.0, %v962
        %v965 = vsub.f32 0.0, %v963
        %v966 = vmul.f32 %v964, 1.442695
        %v967 = vpow.pop %v966
        %v968 = vmul.f32 %v965, 1.442695
        %v969 = vpow.pop %v968
        %v970 = vadd.f32 %v967, 1.0
        %v971 = vadd.f32 %v969, 1.0
        %v972 = vrcp.pop %v970
        %v973 = vrcp.pop %v971
        %v976 = vcombine.low %v972, %v973
        %v978 = vunpack.c.l.s4 1966171168
        %v979 = vunpack.c.0.s8 %v978
        %v980 = vlaneseq
        %v981 = vshrl.u32 %v980, 7
        %v982 = vsub.s32 %v979, %v981
        %v983 = vrot.slane %v976, %v982
        %v985 = vunpack.c.l.s4 1966171168
        %v986 = vunpack.c.0.s8 %v985
        %v987 = vlaneseq
        %v988 = vshrl.u32 %v987, 7
        %v989 = vsub.s32 %v986, %v988
        %v990 = vrot.slane %v983, %v989
        %992 = vst.msk [vmem:[%s286 + $0x2] sm:$0x3] %vm712, %v990
        %s993 = sand.u32 %s183, 1
        %s994 = scalar_lea.sflag [#allocation4], %s993
        %s995 = sand.u32 %s183, 1
        %s996 = smul.addr %s995, 4
        %s997 = scalar_lea.vmem [#allocation3], %s996
        // Predicated region
        $region49: #{tpu_custom_call.1} parent=47 // pred_check
          %p998 = pneg %p193
        $region50: #{tpu_custom_call.1} parent=47 // pred_check_branch
          %1000 = sbr.rel (%p998) target = $region52
        $region51: #{tpu_custom_call.1} parent=47 // pred_region
          %s1001 = smul.u32 4, %s23
          %s1002 = ssub.s32 5, %s1001
          %p1003 = scmp.lt.s32.totalorder %s1002, 4
          %s1004 = scalar_select %p1003, %s1002, 4
          %s1005 = smul.u32 16, %s1004
          %s1007 = ssub.s32 64, %s1005
          %1008 = vsyncadd %s994, %s1007
          %p1009 = scmp.ne.s32.totalorder 0, %s1005
          %s1010 = smul.addr %s1001, 16
          %s1011 = scalar_lea.hbm %s7, %s1010
          %s1012 = sshll.u32 %s1004, 4
          %s1013 = sshll.u32 %s997, 4
          %s1014 = int_to_ptr.vmem [resolvable:$true] %s1013
          %1016 = dma.vmem_to_hbm [thread:$0]  (%p1009), %s1014, %s1012, %s1011, %s994
        $region52: #{tpu_custom_call.1} parent=47 // pred_fallthru
          _
      $region48: #{tpu_custom_call.1} parent=5 // pred_fallthru
        _
      %p1017 = scmp.le.s32.totalorder 2, %s18
      // Predicated region
      $region53: #{tpu_custom_call.1} parent=5 // pred_check
        %p1018 = pneg %p1017
      $region54: #{tpu_custom_call.1} parent=5 // pred_check_branch
        %1020 = sbr.rel (%p1018) target = $region56
      $region55: #{tpu_custom_call.1} parent=5 // pred_region
        %s1021 = ssub.s32 %s18, 2
        // Predicated region
        $region57: #{tpu_custom_call.1} parent=55 // pred_check
          %p1022 = pneg %p199
        $region58: #{tpu_custom_call.1} parent=55 // pred_check_branch
          %1024 = sbr.rel (%p1022) target = $region60
        $region59: #{tpu_custom_call.1} parent=55 // pred_region
          %s1025 = sand.u32 %s184, 1
          %s1026 = scalar_lea.sflag [#allocation4], %s1025
          %s1027 = sand.u32 %s184, 1
          %s1028 = smul.addr %s1027, 4
          %s1029 = scalar_lea.vmem [#allocation3], %s1028
          %1030 = dma.done %s1026, 64
        $region60: #{tpu_custom_call.1} parent=55 // pred_fallthru
          _
      $region56: #{tpu_custom_call.1} parent=5 // pred_fallthru
        _
    $region6: #{tpu_custom_call.1} parent=1 // loop_footer
      %s22 = sadd.s32 1, %s18
    $region7: #{tpu_custom_call.1} parent=1 // loop_footer_branch
      %17 = sbr.rel target = $region3
    $region8: #{tpu_custom_call.1} parent=1 // loop_exit
      _
    %1031 = vsyncpa [#allocation4], 1
    %s1032 = scalar_lea.sflag [#allocation4], 1
    %1033 = vsyncpa %s1032, 1

</llo_original>
